<compile_context>
chip_gen: v7x
topology: tpu7x:2x2x1
jax: 0.10.0
libtpu: 0.0.40
codegen_flags: <defaults>
</compile_context>

<pallas_src>
import functools
import math

import jax
import jax.numpy as jnp
from jax.experimental import pallas as pl
from jax.experimental.pallas import tpu as pltpu


def _round_up(n, m):
    return ((n + m - 1) // m) * m


def _vmem_budget_bytes():
    """Generation-aware VMEM budget (leaves headroom for internal scratch)."""
    try:
        cap = pltpu.get_tpu_info().vmem_capacity_bytes
    except Exception:  # unknown runtime: assume the smallest (v7x, 64 MiB)
        cap = 64 * 1024 * 1024
    # ~72% of physical: ~92 MiB on v5e/v6e (128 MiB), ~46 MiB on v7x (64 MiB).
    return int(cap * 0.72)


def _resident_spec(shape):
    """Full-array BlockSpec for weights/biases.

    Their block index never changes across grid steps, so double-buffering
    would only waste VMEM -> request single buffering.
    """
    try:
        return pl.BlockSpec(shape, lambda i: (0, 0),
                            pipeline_mode=pl.Buffered(1))
    except TypeError:  # older jax without pipeline_mode: default buffering
        return pl.BlockSpec(shape, lambda i: (0, 0))


def _pick_tile(dim, prefer=512):
    """Largest of (512, 256, 128) dividing dim, else the full dim."""
    for t in (prefer, 256, 128):
        if dim >= t and dim % t == 0:
            return t
    return dim


# ----------------------------------------------------------------------------
# Fused kernel: whole MLP for one batch tile, all weights resident in VMEM.
# ----------------------------------------------------------------------------
def _mlp_fused_kernel(num_layers, x_ref, *refs):
    """refs = [w_0, b_0, ..., w_{L-1}, b_{L-1}, out_ref].

    Weights are (in, out) = PyTorch nn.Linear weight transposed.  Hidden dims
    are pre-padded (zero rows/cols + zero bias) so padded lanes stay exactly 0
    through ReLU; the first K dim and the last N dim are unpadded.
    """
    out_ref = refs[-1]
    h = x_ref[...]                                   # (TB, input_dim)
    for li in range(num_layers):
        w = refs[2 * li][...]                        # (in_i, out_i) compute dtype
        b = refs[2 * li + 1][...]                    # (1, out_i)    f32
        # MXU matmul with f32 accumulation; bias add / ReLU stay in f32 (VPU).
        h = jnp.dot(h.astype(w.dtype), w,
                    preferred_element_type=jnp.float32) + b
        if li < num_layers - 1:
            h = jnp.maximum(h, 0.0)
    out_ref[...] = h.astype(out_ref.dtype)


# ----------------------------------------------------------------------------
# Streaming fallback kernel: one Linear(+ReLU) layer, K-blocked accumulation.
# ----------------------------------------------------------------------------
def _linear_kernel(apply_relu, x_ref, w_ref, b_ref, o_ref, acc_ref):
    @pl.when(pl.program_id(2) == 0)
    def _():
        acc_ref[...] = jnp.zeros_like(acc_ref)

    acc_ref[...] += jnp.dot(x_ref[...], w_ref[...],
                            preferred_element_type=jnp.float32)

    @pl.when(pl.program_id(2) == pl.num_programs(2) - 1)
    def _():
        r = acc_ref[...] + b_ref[...]
        if apply_relu:
            r = jnp.maximum(r, 0.0)
        o_ref[...] = r.astype(o_ref.dtype)


# ----------------------------------------------------------------------------
# Parameter preparation (pad + cast ONCE, reuse across forward calls).
# ----------------------------------------------------------------------------
def prepare_simple_mlp_params(weights, biases, compute_dtype=jnp.bfloat16):
    """weights[i]: (in_i, out_i) (= PyTorch weight.T), biases[i]: (out_i,).

    Hidden dims are zero-padded to multiples of 128 (lane-dense intermediate
    activations); input and output dims stay unpadded so x DMA and the final
    HBM writeback stay as narrow as the real problem.
    """
    assert len(weights) == len(biases)
    dims = [weights[0].shape[0]] + [w.shape[1] for w in weights]
    pdims = list(dims)
    for i in range(1, len(dims) - 1):        # pad hidden dims only
        pdims[i] = _round_up(dims[i], 128)

    w_p, b_p = [], []
    for li, (w, b) in enumerate(zip(weights, biases)):
        tgt = (pdims[li], pdims[li + 1])
        if tgt == tuple(w.shape):
            wp = w.astype(compute_dtype)
        else:
            wp = jnp.zeros(tgt, compute_dtype)
            wp = wp.at[:w.shape[0], :w.shape[1]].set(w.astype(compute_dtype))
        bp = jnp.zeros((1, pdims[li + 1]), jnp.float32)
        bp = bp.at[0, :b.shape[0]].set(b.astype(jnp.float32))
        w_p.append(wp)
        b_p.append(bp)

    return dict(weights=w_p, biases=b_p, dims=dims, pdims=pdims,
                compute_dtype=compute_dtype)


# ----------------------------------------------------------------------------
# Forward pass.
# ----------------------------------------------------------------------------
def simple_mlp_forward(x, params, *, block_b=512, force_stream=False):
    """x: (B, input_dim) f32.  params: from prepare_simple_mlp_params.

    Returns (B, output_dim) f32.
    """
    w_p, b_p = params["weights"], params["biases"]
    dims, pdims = params["dims"], params["pdims"]
    cd = params["compute_dtype"]
    num_layers = len(w_p)

    B, input_dim = x.shape
    assert input_dim == dims[0], "x feature dim does not match the MLP"
    output_dim = dims[-1]

    ebytes = jnp.dtype(cd).itemsize
    budget = _vmem_budget_bytes()
    weight_bytes = (sum(w.size * ebytes for w in w_p)
                    + sum(b.size * 4 for b in b_p))     # single-buffered

    def fused_tile_bytes(tb):
        return (2 * tb * pdims[0] * ebytes               # x tile (double-buffered)
                + 2 * tb * pdims[-1] * 4                 # out tile (double-buffered)
                + 2 * tb * max(pdims) * 4)               # f32 intermediate activations

    # Batch tile: as large as block_b, a multiple of 8, small enough that
    # tile + resident weights fit the generation-aware VMEM budget.
    tb = max(8, min(_round_up(block_b, 8), _round_up(B, 8)))
    while tb > 8 and weight_bytes + fused_tile_bytes(tb) > budget:
        tb = max(8, _round_up(tb // 2, 8))

    use_fused = (not force_stream) and \
        (weight_bytes + fused_tile_bytes(tb) <= budget)

    x_c = x.astype(cd)

    if use_fused:
        b_pad = _round_up(B, tb)
        if b_pad != B:
            x_c = jnp.pad(x_c, ((0, b_pad - B), (0, 0)))
        grid = (b_pad // tb,)

        in_specs = [pl.BlockSpec((tb, pdims[0]), lambda i: (i, 0))]
        inputs = [x_c]
        for li in range(num_layers):
            in_specs.append(_resident_spec(w_p[li].shape))
            inputs.append(w_p[li])
            in_specs.append(_resident_spec(b_p[li].shape))
            inputs.append(b_p[li])

        out_specs = pl.BlockSpec((tb, pdims[-1]), lambda i: (i, 0))
        out_shape = jax.ShapeDtypeStruct((b_pad, pdims[-1]), jnp.float32)

        flops = 2 * b_pad * sum(pdims[i] * pdims[i + 1]
                                for i in range(num_layers))
        bytes_accessed = (x_c.size * ebytes + weight_bytes
                          + b_pad * pdims[-1] * 4)
        cost = pl.CostEstimate(flops=int(flops), transcendentals=0,
                               bytes_accessed=int(bytes_accessed))

        out = pl.pallas_call(
            functools.partial(_mlp_fused_kernel, num_layers),
            grid=grid,
            in_specs=in_specs,
            out_specs=out_specs,
            out_shape=out_shape,
            compiler_params=pltpu.CompilerParams(
                dimension_semantics=("parallel",),
                vmem_limit_bytes=int(budget)),
            cost_estimate=cost,
        )(*inputs)
        return out[:B]

    # ---- weight-streaming fallback: layer-by-layer tiled matmuls -----------
    # Used when the resident padded weights exceed the per-core VMEM budget
    # (hit first on v7x's 64 MiB).  Hidden dims are already 128-multiples so
    # K/N tile cleanly; the first K and the last N use full-dim blocks.
    tm = max(8, min(256, _round_up(B, 8)))
    b_pad = _round_up(B, tm)
    h = x_c
    if b_pad != B:
        h = jnp.pad(h, ((0, b_pad - B), (0, 0)))

    for li in range(num_layers):
        last = (li == num_layers - 1)
        w, b = w_p[li], b_p[li]
        K, N = w.shape
        tk, tn = _pick_tile(K), _pick_tile(N)
        grid = (b_pad // tm, N // tn, K // tk)
        out_dtype = jnp.float32 if last else cd
        h = pl.pallas_call(
            functools.partial(_linear_kernel, not last),
            grid=grid,
            in_specs=[pl.BlockSpec((tm, tk), lambda i, j, k: (i, k)),
                      pl.BlockSpec((tk, tn), lambda i, j, k: (k, j)),
                      pl.BlockSpec((1, tn), lambda i, j, k: (0, j))],
            out_specs=pl.BlockSpec((tm, tn), lambda i, j, k: (i, j)),
            out_shape=jax.ShapeDtypeStruct((b_pad, N), out_dtype),
            scratch_shapes=[pltpu.VMEM((tm, tn), jnp.float32)],
            compiler_params=pltpu.CompilerParams(
                dimension_semantics=("parallel", "parallel", "arbitrary"),
                vmem_limit_bytes=int(budget)),
        )(h, w, b)
    return h[:B]


# ----------------------------------------------------------------------------
# Init + pure-JAX reference (mirrors SimpleMLP.forward, eval mode).
# ----------------------------------------------------------------------------
def init_simple_mlp_params(key, input_dim, output_dim, hidden_dim=(32,)):
    """nn.Linear-style init: U(-1/sqrt(fan_in), 1/sqrt(fan_in)) for W and b."""
    dims = [input_dim] + list(hidden_dim) + [output_dim]
    weights, biases = [], []
    keys = jax.random.split(key, 2 * (len(dims) - 1))
    for li, (d_in, d_out) in enumerate(zip(dims[:-1], dims[1:])):
        bound = 1.0 / math.sqrt(d_in)
        weights.append(jax.random.uniform(
            keys[2 * li], (d_in, d_out), jnp.float32, -bound, bound))
        biases.append(jax.random.uniform(
            keys[2 * li + 1], (d_out,), jnp.float32, -bound, bound))
    return weights, biases


def reference_forward(x, weights, biases):
    h = x
    n = len(weights)
    for li in range(n):
        h = jnp.dot(h, weights[li],
                    precision=jax.lax.Precision.HIGHEST) + biases[li]
        if li < n - 1:
            h = jnp.maximum(h, 0.0)
    return h


if __name__ == "__main__":
    input_dim, output_dim = 16, 4
    hidden_dim = [32]

    key = jax.random.PRNGKey(0)
    k_params, k_x, k_x2 = jax.random.split(key, 3)
    weights, biases = init_simple_mlp_params(k_params, input_dim, output_dim,
                                             hidden_dim)

    # Padded / cast weights prepared once, reused across calls.
    params_f32 = prepare_simple_mlp_params(weights, biases,
                                           compute_dtype=jnp.float32)
    params_bf16 = prepare_simple_mlp_params(weights, biases)   # default bf16

    # Small batch (single grid step), strict f32 check.
    x = jax.random.normal(k_x, (2, input_dim), jnp.float32)
    out = jax.block_until_ready(simple_mlp_forward(x, params_f32))
    ref = reference_forward(x, weights, biases)
    assert out.shape == (2, output_dim)
    assert jnp.allclose(out, ref, atol=1e-4, rtol=1e-4), "f32 fused mismatch"

    # Larger batch with a smaller tile to exercise the batch grid / pipelining.
    x_big = jax.random.normal(k_x2, (300, input_dim), jnp.float32)
    ref_big = reference_forward(x_big, weights, biases)
    out_big = jax.block_until_ready(
        simple_mlp_forward(x_big, params_f32, block_b=128))
    assert out_big.shape == (300, output_dim)
    assert jnp.allclose(out_big, ref_big, atol=1e-4, rtol=1e-4), "f32 tiled mismatch"

    # Default bf16 matmul-operand path (MXU fast path), f32 accumulation.
    out_bf16 = jax.block_until_ready(simple_mlp_forward(x_big, params_bf16))
    assert jnp.allclose(out_bf16, ref_big, atol=5e-2, rtol=5e-2), "bf16 mismatch"

    # Weight-streaming fallback (forced here; auto-used when residents > VMEM).
    out_stream = jax.block_until_ready(
        simple_mlp_forward(x_big, params_f32, force_stream=True))
    assert jnp.allclose(out_stream, ref_big, atol=1e-4, rtol=1e-4), "stream mismatch"

    print("KERNEL_OK")
</pallas_src>

<mosaic_0001>
module attributes {stable_mosaic.version = 11 : i64} {
  func.func @_mlp_fused_kernel(%arg0: i32, %arg1: memref<8x16xf32, #tpu.memory_space<vmem>>, %arg2: memref<16x128xf32, #tpu.memory_space<vmem>>, %arg3: memref<1x128xf32, #tpu.memory_space<vmem>>, %arg4: memref<128x4xf32, #tpu.memory_space<vmem>>, %arg5: memref<1x4xf32, #tpu.memory_space<vmem>>, %arg6: memref<8x4xf32, #tpu.memory_space<vmem>>) attributes {dimension_semantics = [#tpu.dimension_semantics<parallel>], iteration_bounds = array<i64: 1>, scalar_prefetch = 0 : i64, scratch_operands = 0 : i64, tpu.core_type = #tpu.core_type<tc>, window_params = [{transform_indices = @transform_0, window_bounds = array<i64: 8, 16>}, {pipeline_mode = #tpu.pipeline_mode<synchronous>, transform_indices = @transform_1, window_bounds = array<i64: 16, 128>}, {pipeline_mode = #tpu.pipeline_mode<synchronous>, transform_indices = @transform_2, window_bounds = array<i64: 1, 128>}, {pipeline_mode = #tpu.pipeline_mode<synchronous>, transform_indices = @transform_3, window_bounds = array<i64: 128, 4>}, {pipeline_mode = #tpu.pipeline_mode<synchronous>, transform_indices = @transform_4, window_bounds = array<i64: 1, 4>}, {transform_indices = @transform_5, window_bounds = array<i64: 8, 4>}]} {
    %c0 = arith.constant 0 : index
    %c0_0 = arith.constant 0 : index
    %0 = vector.load %arg1[%c0, %c0_0] : memref<8x16xf32, #tpu.memory_space<vmem>>, vector<8x16xf32>
    %c0_1 = arith.constant 0 : index
    %c0_2 = arith.constant 0 : index
    %1 = vector.load %arg2[%c0_1, %c0_2] : memref<16x128xf32, #tpu.memory_space<vmem>>, vector<16x128xf32>
    %c0_3 = arith.constant 0 : index
    %c0_4 = arith.constant 0 : index
    %2 = vector.load %arg3[%c0_3, %c0_4] : memref<1x128xf32, #tpu.memory_space<vmem>>, vector<1x128xf32>
    %cst = arith.constant dense<0.000000e+00> : vector<8x128xf32>
    %3 = tpu.matmul %0, %1, %cst {dimension_numbers = #tpu.dot_dimension_numbers<[1], [0], [0], [1], [0, 0, 1, 1], [], []>} : vector<8x16xf32>, vector<16x128xf32>, vector<8x128xf32> -> vector<8x128xf32>
    %4 = vector.broadcast %2 : vector<1x128xf32> to vector<8x128xf32>
    %5 = arith.addf %3, %4 : vector<8x128xf32>
    %cst_5 = arith.constant 0.000000e+00 : f32
    %6 = vector.broadcast %cst_5 : f32 to vector<8x128xf32>
    %7 = arith.maximumf %5, %6 : vector<8x128xf32>
    %c0_6 = arith.constant 0 : index
    %c0_7 = arith.constant 0 : index
    %8 = vector.load %arg4[%c0_6, %c0_7] : memref<128x4xf32, #tpu.memory_space<vmem>>, vector<128x4xf32>
    %c0_8 = arith.constant 0 : index
    %c0_9 = arith.constant 0 : index
    %9 = vector.load %arg5[%c0_8, %c0_9] : memref<1x4xf32, #tpu.memory_space<vmem>>, vector<1x4xf32>
    %cst_10 = arith.constant dense<0.000000e+00> : vector<8x4xf32>
    %10 = tpu.matmul %7, %8, %cst_10 {dimension_numbers = #tpu.dot_dimension_numbers<[1], [0], [0], [1], [0, 0, 1, 1], [], []>} : vector<8x128xf32>, vector<128x4xf32>, vector<8x4xf32> -> vector<8x4xf32>
    %11 = vector.broadcast %9 : vector<1x4xf32> to vector<8x4xf32>
    %12 = arith.addf %10, %11 : vector<8x4xf32>
    %c0_11 = arith.constant 0 : index
    %c0_12 = arith.constant 0 : index
    %13 = vector.load %arg6[%c0_11, %c0_12] : memref<8x4xf32, #tpu.memory_space<vmem>>, vector<8x4xf32>
    tpu.vector_store %arg6[%c0_11, %c0_12], %12 {strides = array<i32>} : memref<8x4xf32, #tpu.memory_space<vmem>>, vector<8x4xf32>,
    return
  }
  func.func @transform_0(%arg0: i32) -> (i32, i32) {
    %c0_i32 = arith.constant 0 : i32
    %c0_i32_0 = arith.constant 0 : i32
    return %arg0, %c0_i32 : i32, i32
  }
  func.func @transform_1(%arg0: i32) -> (i32, i32) {
    %c0_i32 = arith.constant 0 : i32
    %c0_i32_0 = arith.constant 0 : i32
    %c0_i32_1 = arith.constant 0 : i32
    return %c0_i32, %c0_i32_0 : i32, i32
  }
  func.func @transform_2(%arg0: i32) -> (i32, i32) {
    %c0_i32 = arith.constant 0 : i32
    %c0_i32_0 = arith.constant 0 : i32
    %c0_i32_1 = arith.constant 0 : i32
    return %c0_i32, %c0_i32_0 : i32, i32
  }
  func.func @transform_3(%arg0: i32) -> (i32, i32) {
    %c0_i32 = arith.constant 0 : i32
    %c0_i32_0 = arith.constant 0 : i32
    %c0_i32_1 = arith.constant 0 : i32
    return %c0_i32, %c0_i32_0 : i32, i32
  }
  func.func @transform_4(%arg0: i32) -> (i32, i32) {
    %c0_i32 = arith.constant 0 : i32
    %c0_i32_0 = arith.constant 0 : i32
    %c0_i32_1 = arith.constant 0 : i32
    return %c0_i32, %c0_i32_0 : i32, i32
  }
  func.func @transform_5(%arg0: i32) -> (i32, i32) {
    %c0_i32 = arith.constant 0 : i32
    %c0_i32_0 = arith.constant 0 : i32
    return %arg0, %c0_i32 : i32, i32
  }
}

</mosaic_0001>

<llo_original>
// kernel: tpu_custom_call.1
$region0: #{tpu_custom_call.1}
  #allocation0 [shape = 'u32[]', space=smem, size = 0x4, offset = 0x4, fixed_abs, tag = 'smem constant byte address 0x4 - core index']
  #allocation1 [shape = 'u32[144,128]{1,0:T(1,128)}', space=vmem, size = 0x12000, scoped, tag = 'internal scratch']
  %s0 = inlined_call_operand.vmem [shape: f32[8,16], index: 0, kind: input, shape index: {}]
  %s1 = inlined_call_operand.vmem [shape: f32[16,128], index: 1, kind: input, shape index: {}]
  %s2 = inlined_call_operand.vmem [shape: f32[1,128], index: 2, kind: input, shape index: {}]
  %s3 = inlined_call_operand.vmem [shape: f32[128,4], index: 3, kind: input, shape index: {}]
  %s4 = inlined_call_operand.vmem [shape: f32[1,4], index: 4, kind: input, shape index: {}]
  %s5 = inlined_call_operand.vmem [shape: f32[8,4], index: 5, kind: output, shape index: {}]
  %s6 = sld [smem:[#allocation0]]
  $region30: #{tpu_custom_call.1} parent=0
    _
  %s8 = ssub.s32 1, %s6
  %s9 = scalar_select 0, %s8, %s6
  // Predicated region
  $region2: #{tpu_custom_call.1} parent=0 // pred_check
    _
  $region3: #{tpu_custom_call.1} parent=0 // pred_check_branch
    %11 = sbr.rel (0) target = $region5
  $region4: #{tpu_custom_call.1} parent=0 // pred_region
    _
  $region5: #{tpu_custom_call.1} parent=0 // pred_fallthru
    _
  // Predicated region
  $region6: #{tpu_custom_call.1} parent=0 // pred_check
    _
  $region7: #{tpu_custom_call.1} parent=0 // pred_check_branch
    %13 = sbr.rel (0) target = $region9
  $region8: #{tpu_custom_call.1} parent=0 // pred_region
    _
  $region9: #{tpu_custom_call.1} parent=0 // pred_fallthru
    _
  // Predicated region
  $region10: #{tpu_custom_call.1} parent=0 // pred_check
    _
  $region11: #{tpu_custom_call.1} parent=0 // pred_check_branch
    %15 = sbr.rel (0) target = $region13
  $region12: #{tpu_custom_call.1} parent=0 // pred_region
    _
  $region13: #{tpu_custom_call.1} parent=0 // pred_fallthru
    _
  // Predicated region
  $region14: #{tpu_custom_call.1} parent=0 // pred_check
    _
  $region15: #{tpu_custom_call.1} parent=0 // pred_check_branch
    %17 = sbr.rel (0) target = $region17
  $region16: #{tpu_custom_call.1} parent=0 // pred_region
    _
  $region17: #{tpu_custom_call.1} parent=0 // pred_fallthru
    _
  // Predicated region
  $region18: #{tpu_custom_call.1} parent=0 // pred_check
    _
  $region19: #{tpu_custom_call.1} parent=0 // pred_check_branch
    %19 = sbr.rel (0) target = $region21
  $region20: #{tpu_custom_call.1} parent=0 // pred_region
    _
  $region21: #{tpu_custom_call.1} parent=0 // pred_fallthru
    _
  %v20 = vld [vmem:[%s0] sm:$0xff]
  %v21 = vld [vmem:[%s1] sm:$0xff]
  %v22 = vld [vmem:[%s1 + $0x8] sm:$0xff]
  %v23 = vld [vmem:[%s2] sm:$0x1]
  %v25 = vlaneseq
  %v26 = vshrl.u32 %v25, 7
  %v27 = vsub.s32 0, %v26
  %v28 = vrot.slane %v23, %v27
  %vm30 = vcmask 130048
  %v32 = vsel %vm30, %v20, 0
  %34 = vmatprep.subr.mxu0 0.0
  %35 = vmatpush1.msra.mxu0 %v21
  %36 = vmatprep.subr.mxu0 0.0
  %37 = vmatpush1.msra.mxu0 %v22
  %38 = vmatprep.subr.mxu0 0.0
  %39 = vmatpush1.msra.mxu0 0.0
  %40 = vmatprep.subr.mxu0 0.0
  %41 = vmatpush1.msra.mxu0 0.0
  %42 = vmatprep.subr.mxu0 0.0
  %43 = vmatpush1.msra.mxu0 0.0
  %44 = vmatprep.subr.mxu0 0.0
  %45 = vmatpush1.msra.mxu0 0.0
  %46 = vmatprep.subr.mxu0 0.0
  %47 = vmatpush1.msra.mxu0 0.0
  %48 = vmatprep.subr.mxu0 0.0
  %49 = vmatpush1.msra.mxu0 0.0
  %50 = vmatprep.subr.mxu0 0.0
  %51 = vmatpush1.msra.mxu0 0.0
  %52 = vmatprep.subr.mxu0 0.0
  %53 = vmatpush1.msra.mxu0 0.0
  %54 = vmatprep.subr.mxu0 0.0
  %55 = vmatpush1.msra.mxu0 0.0
  %56 = vmatprep.subr.mxu0 0.0
  %57 = vmatpush1.msra.mxu0 0.0
  %58 = vmatprep.subr.mxu0 0.0
  %59 = vmatpush1.msra.mxu0 0.0
  %60 = vmatprep.subr.mxu0 0.0
  %61 = vmatpush1.msra.mxu0 0.0
  %62 = vmatprep.subr.mxu0 0.0
  %63 = vmatpush1.msra.mxu0 0.0
  %64 = vmatprep.subr.mxu0 0.0
  %65 = vmatpush1.msra.mxu0 0.0
  %66 = vmatprep.subr.mxu0 0.0
  %67 = vmatpush1.msra.mxu0 0.0
  %68 = vmatprep.subr.mxu0 0.0
  %69 = vmatpush1.msra.mxu0 0.0
  %70 = vmatprep.subr.mxu0 0.0
  %71 = vmatpush1.msra.mxu0 0.0
  %72 = vmatprep.subr.mxu0 0.0
  %73 = vmatpush1.msra.mxu0 0.0
  %74 = vmatprep.subr.mxu0 0.0
  %75 = vmatpush1.msra.mxu0 0.0
  %76 = vmatprep.subr.mxu0 0.0
  %77 = vmatpush1.msra.mxu0 0.0
  %78 = vmatprep.subr.mxu0 0.0
  %79 = vmatpush1.msra.mxu0 0.0
  %80 = vmatprep.subr.mxu0 0.0
  %81 = vmatpush1.msra.mxu0 0.0
  %82 = vmatprep.subr.mxu0 0.0
  %83 = vmatpush1.msra.mxu0 0.0
  %84 = vmatprep.subr.mxu0 0.0
  %85 = vmatpush1.msra.mxu0 0.0
  %86 = vmatprep.subr.mxu0 0.0
  %87 = vmatpush1.msra.mxu0 0.0
  %88 = vmatprep.subr.mxu0 0.0
  %89 = vmatpush1.msra.mxu0 0.0
  %90 = vmatprep.subr.mxu0 0.0
  %91 = vmatpush1.msra.mxu0 0.0
  %92 = vmatprep.subr.mxu0 0.0
  %93 = vmatpush1.msra.mxu0 0.0
  %94 = vmatprep.subr.mxu0 0.0
  %95 = vmatpush1.msra.mxu0 0.0
  %96 = vmatprep.subr.mxu0 0.0
  %97 = vmatpush1.msra.mxu0 0.0
  %98 = vmatprep.mubr.f32.mxu0 0.0
  %99 = vmatmul.mubr.f32.gmra.mrb[0].mxu0 %v32
  %v100 = vpop.f32.mrb[0].mxu0
  %v101 = vadd.f32 %v28, %v100
  %v102 = vpop.f32.mrb[0].mxu0
  %103 = vdwg.mxu0
  %v104 = vmax.f32 %v101, 0.0
  %v105 = vld [vmem:[%s3] sm:$0xff]
  %v106 = vld [vmem:[%s3 + $0x8] sm:$0xff]
  %v107 = vld [vmem:[%s3 + $0x10] sm:$0xff]
  %v108 = vld [vmem:[%s3 + $0x18] sm:$0xff]
  %v109 = vld [vmem:[%s3 + $0x20] sm:$0xff]
  %v110 = vld [vmem:[%s3 + $0x28] sm:$0xff]
  %v111 = vld [vmem:[%s3 + $0x30] sm:$0xff]
  %v112 = vld [vmem:[%s3 + $0x38] sm:$0xff]
  %v113 = vld [vmem:[%s3 + $0x40] sm:$0xff]
  %v114 = vld [vmem:[%s3 + $0x48] sm:$0xff]
  %v115 = vld [vmem:[%s3 + $0x50] sm:$0xff]
  %v116 = vld [vmem:[%s3 + $0x58] sm:$0xff]
  %v117 = vld [vmem:[%s3 + $0x60] sm:$0xff]
  %v118 = vld [vmem:[%s3 + $0x68] sm:$0xff]
  %v119 = vld [vmem:[%s3 + $0x70] sm:$0xff]
  %v120 = vld [vmem:[%s3 + $0x78] sm:$0xff]
  %v121 = vld [vmem:[%s4] sm:$0x1]
  %v123 = vlaneseq
  %v124 = vshrl.u32 %v123, 7
  %v125 = vsub.s32 0, %v124
  %v126 = vrot.slane %v121, %v125
  %128 = vmatprep.subr.mxu0 0.0
  %129 = vmatpush1.msra.mxu0 %v105
  %130 = vmatprep.subr.mxu0 0.0
  %131 = vmatpush1.msra.mxu0 %v106
  %132 = vmatprep.subr.mxu0 0.0
  %133 = vmatpush1.msra.mxu0 %v107
  %134 = vmatprep.subr.mxu0 0.0
  %135 = vmatpush1.msra.mxu0 %v108
  %136 = vmatprep.subr.mxu0 0.0
  %137 = vmatpush1.msra.mxu0 %v109
  %138 = vmatprep.subr.mxu0 0.0
  %139 = vmatpush1.msra.mxu0 %v110
  %140 = vmatprep.subr.mxu0 0.0
  %141 = vmatpush1.msra.mxu0 %v111
  %142 = vmatprep.subr.mxu0 0.0
  %143 = vmatpush1.msra.mxu0 %v112
  %144 = vmatprep.subr.mxu0 0.0
  %145 = vmatpush1.msra.mxu0 %v113
  %146 = vmatprep.subr.mxu0 0.0
  %147 = vmatpush1.msra.mxu0 %v114
  %148 = vmatprep.subr.mxu0 0.0
  %149 = vmatpush1.msra.mxu0 %v115
  %150 = vmatprep.subr.mxu0 0.0
  %151 = vmatpush1.msra.mxu0 %v116
  %152 = vmatprep.subr.mxu0 0.0
  %153 = vmatpush1.msra.mxu0 %v117
  %154 = vmatprep.subr.mxu0 0.0
  %155 = vmatpush1.msra.mxu0 %v118
  %156 = vmatprep.subr.mxu0 0.0
  %157 = vmatpush1.msra.mxu0 %v119
  %158 = vmatprep.subr.mxu0 0.0
  %159 = vmatpush1.msra.mxu0 %v120
  %160 = vmatprep.subr.mxu0 0.0
  %161 = vmatpush1.msra.mxu0 0.0
  %162 = vmatprep.subr.mxu0 0.0
  %163 = vmatpush1.msra.mxu0 0.0
  %164 = vmatprep.subr.mxu0 0.0
  %165 = vmatpush1.msra.mxu0 0.0
  %166 = vmatprep.subr.mxu0 0.0
  %167 = vmatpush1.msra.mxu0 0.0
  %168 = vmatprep.subr.mxu0 0.0
  %169 = vmatpush1.msra.mxu0 0.0
  %170 = vmatprep.subr.mxu0 0.0
  %171 = vmatpush1.msra.mxu0 0.0
  %172 = vmatprep.subr.mxu0 0.0
  %173 = vmatpush1.msra.mxu0 0.0
  %174 = vmatprep.subr.mxu0 0.0
  %175 = vmatpush1.msra.mxu0 0.0
  %176 = vmatprep.subr.mxu0 0.0
  %177 = vmatpush1.msra.mxu0 0.0
  %178 = vmatprep.subr.mxu0 0.0
  %179 = vmatpush1.msra.mxu0 0.0
  %180 = vmatprep.subr.mxu0 0.0
  %181 = vmatpush1.msra.mxu0 0.0
  %182 = vmatprep.subr.mxu0 0.0
  %183 = vmatpush1.msra.mxu0 0.0
  %184 = vmatprep.subr.mxu0 0.0
  %185 = vmatpush1.msra.mxu0 0.0
  %186 = vmatprep.subr.mxu0 0.0
  %187 = vmatpush1.msra.mxu0 0.0
  %188 = vmatprep.subr.mxu0 0.0
  %189 = vmatpush1.msra.mxu0 0.0
  %190 = vmatprep.subr.mxu0 0.0
  %191 = vmatpush1.msra.mxu0 0.0
  %192 = vmatprep.mubr.f32.mxu0 0.0
  %193 = vmatmul.mubr.f32.gmra.mrb[0].mxu0 %v104
  %v194 = vpop.f32.mrb[0].mxu0
  %v195 = vadd.f32 %v126, %v194
  %v196 = vpop.f32.mrb[0].mxu0
  %197 = vdwg.mxu0
  %vm198 = vcmask 31744
  %199 = vst.msk [vmem:[%s5] sm:$0xff] %vm198, %v195
  // Predicated region
  $region22: #{tpu_custom_call.1} parent=0 // pred_check
    _
  $region23: #{tpu_custom_call.1} parent=0 // pred_check_branch
    %201 = sbr.rel (0) target = $region25
  $region24: #{tpu_custom_call.1} parent=0 // pred_region
    _
  $region25: #{tpu_custom_call.1} parent=0 // pred_fallthru
    _
  // Predicated region
  $region26: #{tpu_custom_call.1} parent=0 // pred_check
    _
  $region27: #{tpu_custom_call.1} parent=0 // pred_check_branch
    %203 = sbr.rel (0) target = $region29
  $region28: #{tpu_custom_call.1} parent=0 // pred_region
    _
  $region29: #{tpu_custom_call.1} parent=0 // pred_fallthru
    _

</llo_original>
